<compile_context>
chip_gen: v6e
topology: v6e:2x2x1
jax: 0.10.0
libtpu: 0.0.40
codegen_flags: <defaults>
</compile_context>

<pallas_src>
import jax
import jax.numpy as jnp
from jax.experimental import pallas as pl
from jax.experimental.pallas import tpu as pltpu


def _round_up(x, m):
    return ((x + m - 1) // m) * m


def _layernorm(h, gamma, beta, eps=1e-5):
    # One-pass variance: E[x^2] - E[x]^2 (clamped at 0 for safety).
    mu = jnp.mean(h, axis=-1, keepdims=True)
    ex2 = jnp.mean(h * h, axis=-1, keepdims=True)
    var = jnp.maximum(ex2 - mu * mu, 0.0)
    return (h - mu) * jax.lax.rsqrt(var + eps) * gamma + beta


def _leaky_relu(h, slope=0.2):
    return jnp.where(h > 0, h, slope * h)


def initpose_enc_kernel(pose_ref, w1_ref, w2_ref, wh_ref, vecs_ref, bh_ref,
                        mean_ref, std_ref):
    """Fused InitPose_Enc forward for one batch tile (all f32).

    vecs_ref rows: [b1, g1, be1, b2, g2, be2], each of length nf.
    wh_ref / bh_ref: mean & std heads fused along lanes ((nf, 2Z) / (1, 2Z));
    the kernel writes the two unpadded (bt, Z) outputs directly.
    """
    b1, g1, be1 = vecs_ref[0:1, :], vecs_ref[1:2, :], vecs_ref[2:3, :]
    b2, g2, be2 = vecs_ref[3:4, :], vecs_ref[4:5, :], vecs_ref[5:6, :]

    # enc block 1: Linear -> LayerNorm -> LeakyReLU(0.2)
    h = jnp.dot(pose_ref[...], w1_ref[...],
                preferred_element_type=jnp.float32) + b1
    h = _leaky_relu(_layernorm(h, g1, be1))

    # enc block 2: Linear -> LayerNorm -> LeakyReLU(0.2)
    h = jnp.dot(h, w2_ref[...], preferred_element_type=jnp.float32) + b2
    h = _leaky_relu(_layernorm(h, g2, be2))

    # fused head weight ref, statically sliced per output (zero-cost views).
    zd = mean_ref.shape[-1]
    mean_ref[...] = (jnp.dot(h, wh_ref[:, :zd],
                             preferred_element_type=jnp.float32)
                     + bh_ref[:, :zd]).astype(mean_ref.dtype)
    std_ref[...] = (jnp.dot(h, wh_ref[:, zd:],
                            preferred_element_type=jnp.float32)
                    + bh_ref[:, zd:]).astype(std_ref.dtype)


def pack_params(params):
    """One-time parameter prep: fuse the two heads and pack the small vectors."""
    nf = params["w1"].shape[1]
    z = params["wm"].shape[1]

    wh = jnp.concatenate([params["wm"], params["ws"]], axis=1)   # (nf, 2Z)
    bh = jnp.concatenate([params["bm"], params["bs"]], axis=1)   # (1, 2Z)
    vecs = jnp.concatenate(
        [params["b1"], params["g1"], params["be1"],
         params["b2"], params["g2"], params["be2"]], axis=0)     # (6, nf)

    return {"w1": params["w1"], "w2": params["w2"], "wh": wh,
            "vecs": vecs, "bh": bh, "dim_z": z, "nf": nf}


def _pick_bt(B):
    """Fixed-cap batch tile: multiple of 8, <= 1024 rows, and >= 2 grid steps
    for moderate/large batches so both v7x TensorCores get work."""
    if B <= 64:
        return _round_up(B, 8)
    half = _round_up(-(-B // 2), 8)   # ceil(B/2), rounded up to 8
    return min(1024, half)


def init_pose_enc(pose, packed, out_dtype=jnp.float32):
    """Run the fused InitPose_Enc forward pass. Returns (mean, std).

    Set out_dtype=jnp.bfloat16 to halve output HBM bytes if the consumer
    tolerates bf16; default keeps full f32 fidelity with the PyTorch module."""
    B, P = pose.shape
    nf, z = packed["nf"], packed["dim_z"]

    bt = _pick_bt(B)
    grid = pl.cdiv(B, bt)
    b_pad = grid * bt
    if b_pad != B:
        # zero-padded tail tile; padded rows are computed and sliced off.
        pose = jnp.pad(pose, ((0, b_pad - B), (0, 0)))

    row = lambda i: (i, 0)   # tiled along batch
    rep = lambda i: (0, 0)   # resident weights / packed params

    # Per-step VMEM: double-buffered (bt,P) pose + two (bt,Z) outputs plus
    # resident weights -- well under the v7x 32 MiB scoped default at bt<=1024,
    # so no explicit vmem_limit_bytes is needed.
    mean, std = pl.pallas_call(
        initpose_enc_kernel,
        out_shape=(jax.ShapeDtypeStruct((b_pad, z), out_dtype),
                   jax.ShapeDtypeStruct((b_pad, z), out_dtype)),
        grid_spec=pltpu.PrefetchScalarGridSpec(
            num_scalar_prefetch=0,
            grid=(grid,),
            in_specs=[
                pl.BlockSpec((bt, P), row),       # pose tile
                pl.BlockSpec((P, nf), rep),       # w1
                pl.BlockSpec((nf, nf), rep),      # w2
                pl.BlockSpec((nf, 2 * z), rep),   # fused head weight [wm|ws]
                pl.BlockSpec((6, nf), rep),       # packed b1/g1/be1/b2/g2/be2
                pl.BlockSpec((1, 2 * z), rep),    # fused head bias [bm|bs]
            ],
            out_specs=(pl.BlockSpec((bt, z), row),
                       pl.BlockSpec((bt, z), row)),
        ),
        compiler_params=pltpu.CompilerParams(
            dimension_semantics=("parallel",)),
    )(pose, packed["w1"], packed["w2"], packed["wh"], packed["vecs"],
      packed["bh"])

    if b_pad != B:
        mean, std = mean[:B], std[:B]
    return mean, std


def make_params(key, pose_size, dim_z_init, nf=64):
    """Deterministic synthetic parameters matching PyTorch module shapes.

    PyTorch nn.Linear weight is (out, in); we store the transpose (in, out)."""
    ks = jax.random.split(key, 4)

    def lin(k, fan_in, fan_out):
        bound = 1.0 / jnp.sqrt(fan_in)
        kw, kb = jax.random.split(k)
        w = jax.random.uniform(kw, (fan_in, fan_out), jnp.float32, -bound, bound)
        b = jax.random.uniform(kb, (1, fan_out), jnp.float32, -bound, bound)
        return w, b

    w1, b1 = lin(ks[0], pose_size, nf)
    w2, b2 = lin(ks[1], nf, nf)
    wm, bm = lin(ks[2], nf, dim_z_init)
    ws, bs = lin(ks[3], nf, dim_z_init)

    return {
        "w1": w1, "b1": b1,
        "g1": jnp.ones((1, nf), jnp.float32), "be1": jnp.zeros((1, nf), jnp.float32),
        "w2": w2, "b2": b2,
        "g2": jnp.ones((1, nf), jnp.float32), "be2": jnp.zeros((1, nf), jnp.float32),
        "wm": wm, "bm": bm,
        "ws": ws, "bs": bs,
    }


def _reference(pose, p):
    """Pure-JAX f32 reference (matches the PyTorch module)."""
    def ln(h, g, b, eps=1e-5):
        mu = h.mean(-1, keepdims=True)
        var = ((h - mu) ** 2).mean(-1, keepdims=True)
        return (h - mu) / jnp.sqrt(var + eps) * g + b

    def lrelu(h):
        return jnp.where(h > 0, h, 0.2 * h)

    h = lrelu(ln(pose @ p["w1"] + p["b1"], p["g1"], p["be1"]))
    h = lrelu(ln(h @ p["w2"] + p["b2"], p["g2"], p["be2"]))
    return h @ p["wm"] + p["bm"], h @ p["ws"] + p["bs"]


if __name__ == "__main__":
    B, POSE_SIZE, DIM_Z_INIT = 8, 32, 16

    key = jax.random.PRNGKey(0)
    k_pose, k_param = jax.random.split(key)

    pose = jax.random.normal(k_pose, (B, POSE_SIZE), jnp.float32)
    params = make_params(k_param, POSE_SIZE, DIM_Z_INIT)
    packed = pack_params(params)

    mean, std = init_pose_enc(pose, packed)
    jax.block_until_ready((mean, std))

    ref_mean, ref_std = _reference(pose, params)
    # full f32 pipeline -> tight agreement with the reference.
    assert jnp.allclose(mean, ref_mean, atol=1e-4, rtol=1e-4)
    assert jnp.allclose(std, ref_std, atol=1e-4, rtol=1e-4)

    print("KERNEL_OK")
</pallas_src>

<mosaic_0001>
module attributes {stable_mosaic.version = 11 : i64} {
  func.func @initpose_enc_kernel(%arg0: i32, %arg1: memref<8x32xf32, #tpu.memory_space<vmem>>, %arg2: memref<32x64xf32, #tpu.memory_space<vmem>>, %arg3: memref<64x64xf32, #tpu.memory_space<vmem>>, %arg4: memref<64x32xf32, #tpu.memory_space<vmem>>, %arg5: memref<6x64xf32, #tpu.memory_space<vmem>>, %arg6: memref<1x32xf32, #tpu.memory_space<vmem>>, %arg7: memref<8x16xf32, #tpu.memory_space<vmem>>, %arg8: memref<8x16xf32, #tpu.memory_space<vmem>>) attributes {dimension_semantics = [#tpu.dimension_semantics<parallel>], iteration_bounds = array<i64: 1>, scalar_prefetch = 0 : i64, scratch_operands = 0 : i64, tpu.core_type = #tpu.core_type<tc>, window_params = [{transform_indices = @transform_0, window_bounds = array<i64: 8, 32>}, {pipeline_mode = #tpu.pipeline_mode<synchronous>, transform_indices = @transform_1, window_bounds = array<i64: 32, 64>}, {pipeline_mode = #tpu.pipeline_mode<synchronous>, transform_indices = @transform_2, window_bounds = array<i64: 64, 64>}, {pipeline_mode = #tpu.pipeline_mode<synchronous>, transform_indices = @transform_3, window_bounds = array<i64: 64, 32>}, {pipeline_mode = #tpu.pipeline_mode<synchronous>, transform_indices = @transform_4, window_bounds = array<i64: 6, 64>}, {pipeline_mode = #tpu.pipeline_mode<synchronous>, transform_indices = @transform_5, window_bounds = array<i64: 1, 32>}, {transform_indices = @transform_6, window_bounds = array<i64: 8, 16>}, {transform_indices = @transform_7, window_bounds = array<i64: 8, 16>}]} {
    %c0 = arith.constant 0 : index
    %c0_0 = arith.constant 0 : index
    %0 = vector.load %arg5[%c0, %c0_0] : memref<6x64xf32, #tpu.memory_space<vmem>>, vector<1x64xf32>
    %c1 = arith.constant 1 : index
    %c0_1 = arith.constant 0 : index
    %1 = vector.load %arg5[%c1, %c0_1] : memref<6x64xf32, #tpu.memory_space<vmem>>, vector<1x64xf32>
    %c2 = arith.constant 2 : index
    %c0_2 = arith.constant 0 : index
    %2 = vector.load %arg5[%c2, %c0_2] : memref<6x64xf32, #tpu.memory_space<vmem>>, vector<1x64xf32>
    %c3 = arith.constant 3 : index
    %c0_3 = arith.constant 0 : index
    %3 = vector.load %arg5[%c3, %c0_3] : memref<6x64xf32, #tpu.memory_space<vmem>>, vector<1x64xf32>
    %c4 = arith.constant 4 : index
    %c0_4 = arith.constant 0 : index
    %4 = vector.load %arg5[%c4, %c0_4] : memref<6x64xf32, #tpu.memory_space<vmem>>, vector<1x64xf32>
    %c5 = arith.constant 5 : index
    %c0_5 = arith.constant 0 : index
    %5 = vector.load %arg5[%c5, %c0_5] : memref<6x64xf32, #tpu.memory_space<vmem>>, vector<1x64xf32>
    %c0_6 = arith.constant 0 : index
    %c0_7 = arith.constant 0 : index
    %6 = vector.load %arg1[%c0_6, %c0_7] : memref<8x32xf32, #tpu.memory_space<vmem>>, vector<8x32xf32>
    %c0_8 = arith.constant 0 : index
    %c0_9 = arith.constant 0 : index
    %7 = vector.load %arg2[%c0_8, %c0_9] : memref<32x64xf32, #tpu.memory_space<vmem>>, vector<32x64xf32>
    %cst = arith.constant dense<0.000000e+00> : vector<8x64xf32>
    %8 = tpu.matmul %6, %7, %cst {dimension_numbers = #tpu.dot_dimension_numbers<[1], [0], [0], [1], [0, 0, 1, 1], [], []>} : vector<8x32xf32>, vector<32x64xf32>, vector<8x64xf32> -> vector<8x64xf32>
    %9 = vector.broadcast %0 : vector<1x64xf32> to vector<8x64xf32>
    %10 = arith.addf %8, %9 : vector<8x64xf32>
    %cst_10 = arith.constant dense<0.000000e+00> : vector<8xf32>
    %11 = vector.multi_reduction <add>, %10, %cst_10 [1] : vector<8x64xf32> to vector<8xf32>
    %12 = vector.shape_cast %11 : vector<8xf32> to vector<8x1xf32>
    %cst_11 = arith.constant 6.400000e+01 : f32
    %13 = vector.broadcast %cst_11 : f32 to vector<8x1xf32>
    %14 = arith.divf %12, %13 : vector<8x1xf32>
    %15 = arith.mulf %10, %10 : vector<8x64xf32>
    %cst_12 = arith.constant dense<0.000000e+00> : vector<8xf32>
    %16 = vector.multi_reduction <add>, %15, %cst_12 [1] : vector<8x64xf32> to vector<8xf32>
    %17 = vector.shape_cast %16 : vector<8xf32> to vector<8x1xf32>
    %cst_13 = arith.constant 6.400000e+01 : f32
    %18 = vector.broadcast %cst_13 : f32 to vector<8x1xf32>
    %19 = arith.divf %17, %18 : vector<8x1xf32>
    %20 = arith.mulf %14, %14 : vector<8x1xf32>
    %21 = arith.subf %19, %20 : vector<8x1xf32>
    %cst_14 = arith.constant 0.000000e+00 : f32
    %22 = vector.broadcast %cst_14 : f32 to vector<8x1xf32>
    %23 = arith.maximumf %21, %22 : vector<8x1xf32>
    %24 = vector.broadcast %14 : vector<8x1xf32> to vector<8x64xf32>
    %25 = arith.subf %10, %24 : vector<8x64xf32>
    %cst_15 = arith.constant 9.99999974E-6 : f32
    %26 = vector.broadcast %cst_15 : f32 to vector<8x1xf32>
    %27 = arith.addf %23, %26 : vector<8x1xf32>
    %28 = math.rsqrt %27 : vector<8x1xf32>
    %29 = vector.broadcast %28 : vector<8x1xf32> to vector<8x64xf32>
    %30 = arith.mulf %25, %29 : vector<8x64xf32>
    %31 = vector.broadcast %1 : vector<1x64xf32> to vector<8x64xf32>
    %32 = arith.mulf %30, %31 : vector<8x64xf32>
    %33 = vector.broadcast %2 : vector<1x64xf32> to vector<8x64xf32>
    %34 = arith.addf %32, %33 : vector<8x64xf32>
    %cst_16 = arith.constant 0.000000e+00 : f32
    %35 = vector.broadcast %cst_16 : f32 to vector<8x64xf32>
    %36 = arith.cmpf ogt, %34, %35 : vector<8x64xf32>
    %cst_17 = arith.constant 2.000000e-01 : f32
    %37 = vector.broadcast %cst_17 : f32 to vector<8x64xf32>
    %38 = arith.mulf %37, %34 : vector<8x64xf32>
    %39 = arith.select %36, %34, %38 : vector<8x64xi1>, vector<8x64xf32>
    %c0_18 = arith.constant 0 : index
    %c0_19 = arith.constant 0 : index
    %40 = vector.load %arg3[%c0_18, %c0_19] : memref<64x64xf32, #tpu.memory_space<vmem>>, vector<64x64xf32>
    %cst_20 = arith.constant dense<0.000000e+00> : vector<8x64xf32>
    %41 = tpu.matmul %39, %40, %cst_20 {dimension_numbers = #tpu.dot_dimension_numbers<[1], [0], [0], [1], [0, 0, 1, 1], [], []>} : vector<8x64xf32>, vector<64x64xf32>, vector<8x64xf32> -> vector<8x64xf32>
    %42 = vector.broadcast %3 : vector<1x64xf32> to vector<8x64xf32>
    %43 = arith.addf %41, %42 : vector<8x64xf32>
    %cst_21 = arith.constant dense<0.000000e+00> : vector<8xf32>
    %44 = vector.multi_reduction <add>, %43, %cst_21 [1] : vector<8x64xf32> to vector<8xf32>
    %45 = vector.shape_cast %44 : vector<8xf32> to vector<8x1xf32>
    %cst_22 = arith.constant 6.400000e+01 : f32
    %46 = vector.broadcast %cst_22 : f32 to vector<8x1xf32>
    %47 = arith.divf %45, %46 : vector<8x1xf32>
    %48 = arith.mulf %43, %43 : vector<8x64xf32>
    %cst_23 = arith.constant dense<0.000000e+00> : vector<8xf32>
    %49 = vector.multi_reduction <add>, %48, %cst_23 [1] : vector<8x64xf32> to vector<8xf32>
    %50 = vector.shape_cast %49 : vector<8xf32> to vector<8x1xf32>
    %cst_24 = arith.constant 6.400000e+01 : f32
    %51 = vector.broadcast %cst_24 : f32 to vector<8x1xf32>
    %52 = arith.divf %50, %51 : vector<8x1xf32>
    %53 = arith.mulf %47, %47 : vector<8x1xf32>
    %54 = arith.subf %52, %53 : vector<8x1xf32>
    %cst_25 = arith.constant 0.000000e+00 : f32
    %55 = vector.broadcast %cst_25 : f32 to vector<8x1xf32>
    %56 = arith.maximumf %54, %55 : vector<8x1xf32>
    %57 = vector.broadcast %47 : vector<8x1xf32> to vector<8x64xf32>
    %58 = arith.subf %43, %57 : vector<8x64xf32>
    %cst_26 = arith.constant 9.99999974E-6 : f32
    %59 = vector.broadcast %cst_26 : f32 to vector<8x1xf32>
    %60 = arith.addf %56, %59 : vector<8x1xf32>
    %61 = math.rsqrt %60 : vector<8x1xf32>
    %62 = vector.broadcast %61 : vector<8x1xf32> to vector<8x64xf32>
    %63 = arith.mulf %58, %62 : vector<8x64xf32>
    %64 = vector.broadcast %4 : vector<1x64xf32> to vector<8x64xf32>
    %65 = arith.mulf %63, %64 : vector<8x64xf32>
    %66 = vector.broadcast %5 : vector<1x64xf32> to vector<8x64xf32>
    %67 = arith.addf %65, %66 : vector<8x64xf32>
    %cst_27 = arith.constant 0.000000e+00 : f32
    %68 = vector.broadcast %cst_27 : f32 to vector<8x64xf32>
    %69 = arith.cmpf ogt, %67, %68 : vector<8x64xf32>
    %cst_28 = arith.constant 2.000000e-01 : f32
    %70 = vector.broadcast %cst_28 : f32 to vector<8x64xf32>
    %71 = arith.mulf %70, %67 : vector<8x64xf32>
    %72 = arith.select %69, %67, %71 : vector<8x64xi1>, vector<8x64xf32>
    %c0_29 = arith.constant 0 : index
    %c0_30 = arith.constant 0 : index
    %73 = vector.load %arg4[%c0_29, %c0_30] : memref<64x32xf32, #tpu.memory_space<vmem>>, vector<64x16xf32>
    %cst_31 = arith.constant dense<0.000000e+00> : vector<8x16xf32>
    %74 = tpu.matmul %72, %73, %cst_31 {dimension_numbers = #tpu.dot_dimension_numbers<[1], [0], [0], [1], [0, 0, 1, 1], [], []>} : vector<8x64xf32>, vector<64x16xf32>, vector<8x16xf32> -> vector<8x16xf32>
    %c0_32 = arith.constant 0 : index
    %c0_33 = arith.constant 0 : index
    %75 = vector.load %arg6[%c0_32, %c0_33] : memref<1x32xf32, #tpu.memory_space<vmem>>, vector<1x16xf32>
    %76 = vector.broadcast %75 : vector<1x16xf32> to vector<8x16xf32>
    %77 = arith.addf %74, %76 : vector<8x16xf32>
    %c0_34 = arith.constant 0 : index
    %c0_35 = arith.constant 0 : index
    %78 = vector.load %arg7[%c0_34, %c0_35] : memref<8x16xf32, #tpu.memory_space<vmem>>, vector<8x16xf32>
    tpu.vector_store %arg7[%c0_34, %c0_35], %77 {strides = array<i32>} : memref<8x16xf32, #tpu.memory_space<vmem>>, vector<8x16xf32>,
    %c0_36 = arith.constant 0 : index
    %c16 = arith.constant 16 : index
    %79 = vector.load %arg4[%c0_36, %c16] : memref<64x32xf32, #tpu.memory_space<vmem>>, vector<64x16xf32>
    %cst_37 = arith.constant dense<0.000000e+00> : vector<8x16xf32>
    %80 = tpu.matmul %72, %79, %cst_37 {dimension_numbers = #tpu.dot_dimension_numbers<[1], [0], [0], [1], [0, 0, 1, 1], [], []>} : vector<8x64xf32>, vector<64x16xf32>, vector<8x16xf32> -> vector<8x16xf32>
    %c0_38 = arith.constant 0 : index
    %c16_39 = arith.constant 16 : index
    %81 = vector.load %arg6[%c0_38, %c16_39] : memref<1x32xf32, #tpu.memory_space<vmem>>, vector<1x16xf32>
    %82 = vector.broadcast %81 : vector<1x16xf32> to vector<8x16xf32>
    %83 = arith.addf %80, %82 : vector<8x16xf32>
    %c0_40 = arith.constant 0 : index
    %c0_41 = arith.constant 0 : index
    %84 = vector.load %arg8[%c0_40, %c0_41] : memref<8x16xf32, #tpu.memory_space<vmem>>, vector<8x16xf32>
    tpu.vector_store %arg8[%c0_40, %c0_41], %83 {strides = array<i32>} : memref<8x16xf32, #tpu.memory_space<vmem>>, vector<8x16xf32>,
    return
  }
  func.func @transform_0(%arg0: i32) -> (i32, i32) {
    %c0_i32 = arith.constant 0 : i32
    %c0_i32_0 = arith.constant 0 : i32
    return %arg0, %c0_i32 : i32, i32
  }
  func.func @transform_1(%arg0: i32) -> (i32, i32) {
    %c0_i32 = arith.constant 0 : i32
    %c0_i32_0 = arith.constant 0 : i32
    %c0_i32_1 = arith.constant 0 : i32
    return %c0_i32, %c0_i32_0 : i32, i32
  }
  func.func @transform_2(%arg0: i32) -> (i32, i32) {
    %c0_i32 = arith.constant 0 : i32
    %c0_i32_0 = arith.constant 0 : i32
    %c0_i32_1 = arith.constant 0 : i32
    return %c0_i32, %c0_i32_0 : i32, i32
  }
  func.func @transform_3(%arg0: i32) -> (i32, i32) {
    %c0_i32 = arith.constant 0 : i32
    %c0_i32_0 = arith.constant 0 : i32
    %c0_i32_1 = arith.constant 0 : i32
    return %c0_i32, %c0_i32_0 : i32, i32
  }
  func.func @transform_4(%arg0: i32) -> (i32, i32) {
    %c0_i32 = arith.constant 0 : i32
    %c0_i32_0 = arith.constant 0 : i32
    %c0_i32_1 = arith.constant 0 : i32
    return %c0_i32, %c0_i32_0 : i32, i32
  }
  func.func @transform_5(%arg0: i32) -> (i32, i32) {
    %c0_i32 = arith.constant 0 : i32
    %c0_i32_0 = arith.constant 0 : i32
    %c0_i32_1 = arith.constant 0 : i32
    return %c0_i32, %c0_i32_0 : i32, i32
  }
  func.func @transform_6(%arg0: i32) -> (i32, i32) {
    %c0_i32 = arith.constant 0 : i32
    %c0_i32_0 = arith.constant 0 : i32
    return %arg0, %c0_i32 : i32, i32
  }
  func.func @transform_7(%arg0: i32) -> (i32, i32) {
    %c0_i32 = arith.constant 0 : i32
    %c0_i32_0 = arith.constant 0 : i32
    return %arg0, %c0_i32 : i32, i32
  }
}

</mosaic_0001>

<llo_original>
// kernel: tpu_custom_call.1
$region0: #{tpu_custom_call.1}
  #allocation0 [shape = 'u32[]', space=smem, size = 0x4, offset = 0x4, fixed_abs, tag = 'smem constant byte address 0x4 - core index']
  #allocation1 [shape = 'u32[144,128]{1,0:T(1,128)}', space=vmem, size = 0x12000, scoped, tag = 'internal scratch']
  %s0 = inlined_call_operand.hbm [shape: f32[8,32], index: 0, kind: input, shape index: {}]
  %s1 = inlined_call_operand.vmem [shape: f32[32,64], index: 1, kind: input, shape index: {}]
  %s2 = inlined_call_operand.vmem [shape: f32[64,64], index: 2, kind: input, shape index: {}]
  %s3 = inlined_call_operand.vmem [shape: f32[64,32], index: 3, kind: input, shape index: {}]
  %s4 = inlined_call_operand.hbm [shape: f32[6,64], index: 4, kind: input, shape index: {}]
  %s5 = inlined_call_operand.vmem [shape: f32[1,32], index: 5, kind: input, shape index: {}]
  %s6 = inlined_call_operand.hbm [shape: f32[8,16], index: 6, kind: output, shape index: {0}]
  %s7 = inlined_call_operand.hbm [shape: f32[8,16], index: 7, kind: output, shape index: {1}]
  %8 = xla_tuple %s6, %s7
  %s9 = sld [smem:[#allocation0]]
  $region50: #{tpu_custom_call.1} parent=0
    _
  %s11 = ssub.s32 1, %s9
  %s12 = scalar_select 0, %s11, %s9
  $region1: #{tpu_custom_call.1} parent=0
    #allocation2 [shape = 'u8[4096]{0}', space=vmem, size = 0x1000, scoped, tag = 'input window, operand 0, single buffered']
    #allocation3 [shape = 's32[1]{0}', space=sflag, size = 0x4, scoped, tag = 'scoped memory for tpu_custom_call.1']
    #allocation4 [shape = 's32[1]{0}', space=sflag, size = 0x4, scoped, tag = 'scoped memory for tpu_custom_call.1']
    #allocation5 [shape = 'u8[4096]{0}', space=vmem, size = 0x1000, scoped, tag = 'input window, operand 4, single buffered']
    #allocation6 [shape = 's32[1]{0}', space=sflag, size = 0x4, scoped, tag = 'scoped memory for tpu_custom_call.1']
    #allocation7 [shape = 'u8[4096]{0}', space=vmem, size = 0x1000, scoped, tag = 'output window, operand 0, single buffered']
    #allocation8 [shape = 'u8[4096]{0}', space=vmem, size = 0x1000, scoped, tag = 'output window, operand 1, single buffered']
    #allocation9 [shape = 's32[1]{0}', space=sflag, size = 0x4, scoped, tag = 'scoped memory for tpu_custom_call.1']
    %13 = vsyncpa [#allocation3], 0
    %14 = vsyncpa [#allocation6], 0
    %15 = vsyncpa [#allocation4], 0
    %16 = vsyncpa [#allocation9], 0
    // Predicated region
    $region2: #{tpu_custom_call.1} parent=1 // pred_check
      _
    $region3: #{tpu_custom_call.1} parent=1 // pred_check_branch
      %18 = sbr.rel (0) target = $region5
    $region4: #{tpu_custom_call.1} parent=1 // pred_region
      %s20 = ssub.s32 128, 128
      %21 = vsyncadd [#allocation3], %s20
      %s23 = sshll.u32 [#allocation2], 4
      %s24 = int_to_ptr.vmem [resolvable:$true] %s23
      %26 = dma.hbm_to_vmem [thread:$0]  %s0, 128, %s24, [#allocation3]
    $region5: #{tpu_custom_call.1} parent=1 // pred_fallthru
      _
    // Predicated region
    $region6: #{tpu_custom_call.1} parent=1 // pred_check
      _
    $region7: #{tpu_custom_call.1} parent=1 // pred_check_branch
      %28 = sbr.rel (0) target = $region9
    $region8: #{tpu_custom_call.1} parent=1 // pred_region
      _
    $region9: #{tpu_custom_call.1} parent=1 // pred_fallthru
      _
    // Predicated region
    $region10: #{tpu_custom_call.1} parent=1 // pred_check
      _
    $region11: #{tpu_custom_call.1} parent=1 // pred_check_branch
      %30 = sbr.rel (0) target = $region13
    $region12: #{tpu_custom_call.1} parent=1 // pred_region
      _
    $region13: #{tpu_custom_call.1} parent=1 // pred_fallthru
      _
    // Predicated region
    $region14: #{tpu_custom_call.1} parent=1 // pred_check
      _
    $region15: #{tpu_custom_call.1} parent=1 // pred_check_branch
      %32 = sbr.rel (0) target = $region17
    $region16: #{tpu_custom_call.1} parent=1 // pred_region
      _
    $region17: #{tpu_custom_call.1} parent=1 // pred_fallthru
      _
    // Predicated region
    $region18: #{tpu_custom_call.1} parent=1 // pred_check
      _
    $region19: #{tpu_custom_call.1} parent=1 // pred_check_branch
      %34 = sbr.rel (0) target = $region21
    $region20: #{tpu_custom_call.1} parent=1 // pred_region
      %s36 = ssub.s32 128, 128
      %37 = vsyncadd [#allocation6], %s36
      %s39 = sshll.u32 [#allocation5], 4
      %s40 = int_to_ptr.vmem [resolvable:$true] %s39
      %42 = dma.hbm_to_vmem [thread:$0]  %s4, 128, %s40, [#allocation6]
    $region21: #{tpu_custom_call.1} parent=1 // pred_fallthru
      _
    // Predicated region
    $region22: #{tpu_custom_call.1} parent=1 // pred_check
      _
    $region23: #{tpu_custom_call.1} parent=1 // pred_check_branch
      %44 = sbr.rel (0) target = $region25
    $region24: #{tpu_custom_call.1} parent=1 // pred_region
      _
    $region25: #{tpu_custom_call.1} parent=1 // pred_fallthru
      _
    // Predicated region
    $region26: #{tpu_custom_call.1} parent=1 // pred_check
      _
    $region27: #{tpu_custom_call.1} parent=1 // pred_check_branch
      %46 = sbr.rel (0) target = $region29
    $region28: #{tpu_custom_call.1} parent=1 // pred_region
      %47 = dma.done [#allocation3], 128
    $region29: #{tpu_custom_call.1} parent=1 // pred_fallthru
      _
    // Predicated region
    $region30: #{tpu_custom_call.1} parent=1 // pred_check
      _
    $region31: #{tpu_custom_call.1} parent=1 // pred_check_branch
      %49 = sbr.rel (0) target = $region33
    $region32: #{tpu_custom_call.1} parent=1 // pred_region
      %50 = dma.done [#allocation6], 128
    $region33: #{tpu_custom_call.1} parent=1 // pred_fallthru
      _
    %v51 = vld [vmem:[#allocation5] sm:$0x1]
    %v52 = vld [vmem:[#allocation5 + $0x1] sm:$0x1]
    %v53 = vld [vmem:[#allocation5 + $0x2] sm:$0x1]
    %v54 = vld [vmem:[#allocation5 + $0x3] sm:$0x1]
    %v55 = vld [vmem:[#allocation5 + $0x4] sm:$0x1]
    %v56 = vld [vmem:[#allocation5 + $0x5] sm:$0x1]
    %v57 = vld [vmem:[#allocation2] sm:$0xff]
    %v58 = vld [vmem:[%s1] sm:$0xff]
    %v59 = vld [vmem:[%s1 + $0x8] sm:$0xff]
    %v60 = vld [vmem:[%s1 + $0x10] sm:$0xff]
    %v61 = vld [vmem:[%s1 + $0x18] sm:$0xff]
    %v62 = vlaneseq
    %v63 = vshrl.u32 %v62, 7
    %v64 = vsub.s32 0, %v63
    %v65 = vrot.slane %v51, %v64
    %vm66 = vcmask 261120
    %v68 = vsel %vm66, %v57, 0
    %70 = vmatprep.subr.mxu0 0.0
    %71 = vmatpush1.msra.mxu0 0.0
    %72 = vmatprep.subr.mxu0 0.0
    %73 = vmatpush1.msra.mxu0 0.0
    %74 = vmatprep.subr.mxu0 0.0
    %75 = vmatpush1.msra.mxu0 0.0
    %76 = vmatprep.subr.mxu0 0.0
    %77 = vmatpush1.msra.mxu0 0.0
    %78 = vmatprep.subr.mxu0 0.0
    %79 = vmatpush1.msra.mxu0 0.0
    %80 = vmatprep.subr.mxu0 0.0
    %81 = vmatpush1.msra.mxu0 0.0
    %82 = vmatprep.subr.mxu0 0.0
    %83 = vmatpush1.msra.mxu0 0.0
    %84 = vmatprep.subr.mxu0 0.0
    %85 = vmatpush1.msra.mxu0 0.0
    %86 = vmatprep.subr.mxu0 0.0
    %87 = vmatpush1.msra.mxu0 0.0
    %88 = vmatprep.subr.mxu0 0.0
    %89 = vmatpush1.msra.mxu0 0.0
    %90 = vmatprep.subr.mxu0 0.0
    %91 = vmatpush1.msra.mxu0 0.0
    %92 = vmatprep.subr.mxu0 0.0
    %93 = vmatpush1.msra.mxu0 0.0
    %94 = vmatprep.subr.mxu0 0.0
    %95 = vmatpush1.msra.mxu0 %v61
    %96 = vmatprep.subr.mxu0 0.0
    %97 = vmatpush1.msra.mxu0 %v60
    %98 = vmatprep.subr.mxu0 0.0
    %99 = vmatpush1.msra.mxu0 %v59
    %100 = vmatprep.subr.mxu0 0.0
    %101 = vmatpush1.msra.mxu0 %v58
    %102 = vmatprep.subr.mxu0 0.0
    %103 = vmatpush2.msra.mxu0 0.0
    %104 = vmatprep.subr.mxu0 0.0
    %105 = vmatpush2.msra.mxu0 0.0
    %106 = vmatprep.subr.mxu0 0.0
    %107 = vmatpush2.msra.mxu0 0.0
    %108 = vmatprep.subr.mxu0 0.0
    %109 = vmatpush2.msra.mxu0 0.0
    %110 = vmatprep.subr.mxu0 0.0
    %111 = vmatpush2.msra.mxu0 0.0
    %112 = vmatprep.subr.mxu0 0.0
    %113 = vmatpush2.msra.mxu0 0.0
    %114 = vmatprep.subr.mxu0 0.0
    %115 = vmatpush2.msra.mxu0 0.0
    %116 = vmatprep.subr.mxu0 0.0
    %117 = vmatpush2.msra.mxu0 0.0
    %118 = vmatprep.subr.mxu0 0.0
    %119 = vmatpush2.msra.mxu0 0.0
    %120 = vmatprep.subr.mxu0 0.0
    %121 = vmatpush2.msra.mxu0 0.0
    %122 = vmatprep.subr.mxu0 0.0
    %123 = vmatpush2.msra.mxu0 0.0
    %124 = vmatprep.subr.mxu0 0.0
    %125 = vmatpush2.msra.mxu0 0.0
    %126 = vmatprep.subr.mxu0 0.0
    %127 = vmatpush2.msra.mxu0 0.0
    %128 = vmatprep.subr.mxu0 0.0
    %129 = vmatpush2.msra.mxu0 0.0
    %130 = vmatprep.subr.mxu0 0.0
    %131 = vmatpush2.msra.mxu0 0.0
    %132 = vmatprep.subr.mxu0 0.0
    %133 = vmatpush2.msra.mxu0 0.0
    %134 = vmatprep.mubr.f32.mxu0 0.0
    %135 = vmatmul.mubr.f32.gmra.mxu0 %v68
    %v136 = vpop.f32.mrf.mxu0
    %v137 = vadd.f32 %v65, %v136
    %v138 = vpop.f32.mrf.mxu0
    %139 = vdwg.mxu0
    %vm140 = vcmask 523264
    %v141 = vsel %vm140, %v137, 0.0
    %142 = vadd.xlane.f32.xlu0 %v141
    %v143 = vpop.xlane.xlu0 %142
    %v144 = vrcp.pop 64.0
    %v145 = vmul.f32 %v143, %v144
    %v146 = vmul.f32 %v137, %v137
    %v147 = vsel %vm140, %v146, 0.0
    %148 = vadd.xlane.f32.xlu0 %v147
    %v149 = vpop.xlane.xlu0 %148
    %v150 = vmul.f32 %v149, %v144
    %v151 = vmul.f32 %v145, %v145
    %v152 = vsub.f32 %v150, %v151
    %v153 = vmax.f32 %v152, 0.0
    %v154 = vsub.f32 %v137, %v145
    %v155 = vadd.f32 %v153, 1e-05
    %v156 = vrsqrt.pop %v155
    %v157 = vmul.f32 %v154, %v156
    %v158 = vlaneseq
    %v159 = vshrl.u32 %v158, 7
    %v160 = vsub.s32 0, %v159
    %v161 = vrot.slane %v52, %v160
    %v162 = vmul.f32 %v157, %v161
    %v163 = vlaneseq
    %v164 = vshrl.u32 %v163, 7
    %v165 = vsub.s32 0, %v164
    %v166 = vrot.slane %v53, %v165
    %v167 = vadd.f32 %v162, %v166
    %vm168 = vcmp.gt.f32.partialorder %v167, 0.0
    %v169 = vmul.f32 %v167, 0.2
    %v170 = vsel %vm168, %v167, %v169
    %v171 = vld [vmem:[%s2] sm:$0xff]
    %v172 = vld [vmem:[%s2 + $0x8] sm:$0xff]
    %v173 = vld [vmem:[%s2 + $0x10] sm:$0xff]
    %v174 = vld [vmem:[%s2 + $0x18] sm:$0xff]
    %v175 = vld [vmem:[%s2 + $0x20] sm:$0xff]
    %v176 = vld [vmem:[%s2 + $0x28] sm:$0xff]
    %v177 = vld [vmem:[%s2 + $0x30] sm:$0xff]
    %v178 = vld [vmem:[%s2 + $0x38] sm:$0xff]
    %v179 = vlaneseq
    %v180 = vshrl.u32 %v179, 7
    %v181 = vsub.s32 0, %v180
    %v182 = vrot.slane %v54, %v181
    %v184 = vsel %vm140, %v170, 0
    %186 = vmatprep.subr.mxu0 0.0
    %187 = vmatpush1.msra.mxu0 0.0
    %188 = vmatprep.subr.mxu0 0.0
    %189 = vmatpush1.msra.mxu0 0.0
    %190 = vmatprep.subr.mxu0 0.0
    %191 = vmatpush1.msra.mxu0 0.0
    %192 = vmatprep.subr.mxu0 0.0
    %193 = vmatpush1.msra.mxu0 0.0
    %194 = vmatprep.subr.mxu0 0.0
    %195 = vmatpush1.msra.mxu0 0.0
    %196 = vmatprep.subr.mxu0 0.0
    %197 = vmatpush1.msra.mxu0 0.0
    %198 = vmatprep.subr.mxu0 0.0
    %199 = vmatpush1.msra.mxu0 0.0
    %200 = vmatprep.subr.mxu0 0.0
    %201 = vmatpush1.msra.mxu0 0.0
    %202 = vmatprep.subr.mxu0 0.0
    %203 = vmatpush1.msra.mxu0 %v178
    %204 = vmatprep.subr.mxu0 0.0
    %205 = vmatpush1.msra.mxu0 %v177
    %206 = vmatprep.subr.mxu0 0.0
    %207 = vmatpush1.msra.mxu0 %v176
    %208 = vmatprep.subr.mxu0 0.0
    %209 = vmatpush1.msra.mxu0 %v175
    %210 = vmatprep.subr.mxu0 0.0
    %211 = vmatpush1.msra.mxu0 %v174
    %212 = vmatprep.subr.mxu0 0.0
    %213 = vmatpush1.msra.mxu0 %v173
    %214 = vmatprep.subr.mxu0 0.0
    %215 = vmatpush1.msra.mxu0 %v172
    %216 = vmatprep.subr.mxu0 0.0
    %217 = vmatpush1.msra.mxu0 %v171
    %218 = vmatprep.subr.mxu0 0.0
    %219 = vmatpush2.msra.mxu0 0.0
    %220 = vmatprep.subr.mxu0 0.0
    %221 = vmatpush2.msra.mxu0 0.0
    %222 = vmatprep.subr.mxu0 0.0
    %223 = vmatpush2.msra.mxu0 0.0
    %224 = vmatprep.subr.mxu0 0.0
    %225 = vmatpush2.msra.mxu0 0.0
    %226 = vmatprep.subr.mxu0 0.0
    %227 = vmatpush2.msra.mxu0 0.0
    %228 = vmatprep.subr.mxu0 0.0
    %229 = vmatpush2.msra.mxu0 0.0
    %230 = vmatprep.subr.mxu0 0.0
    %231 = vmatpush2.msra.mxu0 0.0
    %232 = vmatprep.subr.mxu0 0.0
    %233 = vmatpush2.msra.mxu0 0.0
    %234 = vmatprep.subr.mxu0 0.0
    %235 = vmatpush2.msra.mxu0 0.0
    %236 = vmatprep.subr.mxu0 0.0
    %237 = vmatpush2.msra.mxu0 0.0
    %238 = vmatprep.subr.mxu0 0.0
    %239 = vmatpush2.msra.mxu0 0.0
    %240 = vmatprep.subr.mxu0 0.0
    %241 = vmatpush2.msra.mxu0 0.0
    %242 = vmatprep.subr.mxu0 0.0
    %243 = vmatpush2.msra.mxu0 0.0
    %244 = vmatprep.subr.mxu0 0.0
    %245 = vmatpush2.msra.mxu0 0.0
    %246 = vmatprep.subr.mxu0 0.0
    %247 = vmatpush2.msra.mxu0 0.0
    %248 = vmatprep.subr.mxu0 0.0
    %249 = vmatpush2.msra.mxu0 0.0
    %250 = vmatprep.mubr.f32.mxu0 0.0
    %251 = vmatmul.mubr.f32.gmra.mxu0 %v184
    %v252 = vpop.f32.mrf.mxu0
    %v253 = vadd.f32 %v182, %v252
    %v254 = vpop.f32.mrf.mxu0
    %255 = vdwg.mxu0
    %v256 = vsel %vm140, %v253, 0.0
    %257 = vadd.xlane.f32.xlu0 %v256
    %v258 = vpop.xlane.xlu0 %257
    %v259 = vmul.f32 %v258, %v144
    %v260 = vmul.f32 %v253, %v253
    %v261 = vsel %vm140, %v260, 0.0
    %262 = vadd.xlane.f32.xlu0 %v261
    %v263 = vpop.xlane.xlu0 %262
    %v264 = vmul.f32 %v263, %v144
    %v265 = vmul.f32 %v259, %v259
    %v266 = vsub.f32 %v264, %v265
    %v267 = vmax.f32 %v266, 0.0
    %v268 = vsub.f32 %v253, %v259
    %v269 = vadd.f32 %v267, 1e-05
    %v270 = vrsqrt.pop %v269
    %v271 = vmul.f32 %v268, %v270
    %v272 = vlaneseq
    %v273 = vshrl.u32 %v272, 7
    %v274 = vsub.s32 0, %v273
    %v275 = vrot.slane %v55, %v274
    %v276 = vmul.f32 %v271, %v275
    %v277 = vlaneseq
    %v278 = vshrl.u32 %v277, 7
    %v279 = vsub.s32 0, %v278
    %v280 = vrot.slane %v56, %v279
    %v281 = vadd.f32 %v276, %v280
    %vm282 = vcmp.gt.f32.partialorder %v281, 0.0
    %v283 = vmul.f32 %v281, 0.2
    %v284 = vsel %vm282, %v281, %v283
    %v285 = vld [vmem:[%s3] sm:$0xff]
    %v286 = vld [vmem:[%s3 + $0x8] sm:$0xff]
    %v287 = vld [vmem:[%s3 + $0x10] sm:$0xff]
    %v288 = vld [vmem:[%s3 + $0x18] sm:$0xff]
    %v289 = vld [vmem:[%s3 + $0x20] sm:$0xff]
    %v290 = vld [vmem:[%s3 + $0x28] sm:$0xff]
    %v291 = vld [vmem:[%s3 + $0x30] sm:$0xff]
    %v292 = vld [vmem:[%s3 + $0x38] sm:$0xff]
    %v293 = vld [vmem:[%s5] sm:$0x1]
    %v295 = vlaneseq
    %v296 = vshrl.u32 %v295, 7
    %v297 = vsub.s32 0, %v296
    %v298 = vrot.slane %v293, %v297
    %v301 = vsel %vm140, %v284, 0
    %303 = vmatprep.subr.mxu0 0.0
    %304 = vmatpush1.msra.mxu0 0.0
    %305 = vmatprep.subr.mxu0 0.0
    %306 = vmatpush1.msra.mxu0 0.0
    %307 = vmatprep.subr.mxu0 0.0
    %308 = vmatpush1.msra.mxu0 0.0
    %309 = vmatprep.subr.mxu0 0.0
    %310 = vmatpush1.msra.mxu0 0.0
    %311 = vmatprep.subr.mxu0 0.0
    %312 = vmatpush1.msra.mxu0 0.0
    %313 = vmatprep.subr.mxu0 0.0
    %314 = vmatpush1.msra.mxu0 0.0
    %315 = vmatprep.subr.mxu0 0.0
    %316 = vmatpush1.msra.mxu0 0.0
    %317 = vmatprep.subr.mxu0 0.0
    %318 = vmatpush1.msra.mxu0 0.0
    %319 = vmatprep.subr.mxu0 0.0
    %320 = vmatpush1.msra.mxu0 %v292
    %321 = vmatprep.subr.mxu0 0.0
    %322 = vmatpush1.msra.mxu0 %v291
    %323 = vmatprep.subr.mxu0 0.0
    %324 = vmatpush1.msra.mxu0 %v290
    %325 = vmatprep.subr.mxu0 0.0
    %326 = vmatpush1.msra.mxu0 %v289
    %327 = vmatprep.subr.mxu0 0.0
    %328 = vmatpush1.msra.mxu0 %v288
    %329 = vmatprep.subr.mxu0 0.0
    %330 = vmatpush1.msra.mxu0 %v287
    %331 = vmatprep.subr.mxu0 0.0
    %332 = vmatpush1.msra.mxu0 %v286
    %333 = vmatprep.subr.mxu0 0.0
    %334 = vmatpush1.msra.mxu0 %v285
    %335 = vmatprep.subr.mxu0 0.0
    %336 = vmatpush2.msra.mxu0 0.0
    %337 = vmatprep.subr.mxu0 0.0
    %338 = vmatpush2.msra.mxu0 0.0
    %339 = vmatprep.subr.mxu0 0.0
    %340 = vmatpush2.msra.mxu0 0.0
    %341 = vmatprep.subr.mxu0 0.0
    %342 = vmatpush2.msra.mxu0 0.0
    %343 = vmatprep.subr.mxu0 0.0
    %344 = vmatpush2.msra.mxu0 0.0
    %345 = vmatprep.subr.mxu0 0.0
    %346 = vmatpush2.msra.mxu0 0.0
    %347 = vmatprep.subr.mxu0 0.0
    %348 = vmatpush2.msra.mxu0 0.0
    %349 = vmatprep.subr.mxu0 0.0
    %350 = vmatpush2.msra.mxu0 0.0
    %351 = vmatprep.subr.mxu0 0.0
    %352 = vmatpush2.msra.mxu0 0.0
    %353 = vmatprep.subr.mxu0 0.0
    %354 = vmatpush2.msra.mxu0 0.0
    %355 = vmatprep.subr.mxu0 0.0
    %356 = vmatpush2.msra.mxu0 0.0
    %357 = vmatprep.subr.mxu0 0.0
    %358 = vmatpush2.msra.mxu0 0.0
    %359 = vmatprep.subr.mxu0 0.0
    %360 = vmatpush2.msra.mxu0 0.0
    %361 = vmatprep.subr.mxu0 0.0
    %362 = vmatpush2.msra.mxu0 0.0
    %363 = vmatprep.subr.mxu0 0.0
    %364 = vmatpush2.msra.mxu0 0.0
    %365 = vmatprep.subr.mxu0 0.0
    %366 = vmatpush2.msra.mxu0 0.0
    %367 = vmatprep.mubr.f32.mxu0 0.0
    %368 = vmatmul.mubr.f32.gmra.mxu0 %v301
    %v369 = vpop.f32.mrf.mxu0
    %v370 = vadd.f32 %v298, %v369
    %v371 = vpop.f32.mrf.mxu0
    %372 = vdwg.mxu0
    %vm373 = vcmask 130048
    %374 = vst.msk [vmem:[#allocation7] sm:$0xff] %vm373, %v370
    %v375 = vld [vmem:[%s3] sm:$0xff]
    %v376 = vld [vmem:[%s3 + $0x8] sm:$0xff]
    %v377 = vld [vmem:[%s3 + $0x10] sm:$0xff]
    %v378 = vld [vmem:[%s3 + $0x18] sm:$0xff]
    %v379 = vld [vmem:[%s3 + $0x20] sm:$0xff]
    %v380 = vld [vmem:[%s3 + $0x28] sm:$0xff]
    %v381 = vld [vmem:[%s3 + $0x30] sm:$0xff]
    %v382 = vld [vmem:[%s3 + $0x38] sm:$0xff]
    %v383 = vld [vmem:[%s5] sm:$0x1]
    %v385 = vlaneseq
    %v386 = vshrl.u32 %v385, 7
    %v387 = vsub.s32 0, %v386
    %v388 = vrot.slane %v383, %v387
    %397 = vrot.lane.b32.xlu0 %v375, 112
    %v398 = vpop.permute.xlu0 %397
    %399 = vrot.lane.b32.xlu0 %v376, 112
    %v400 = vpop.permute.xlu0 %399
    %401 = vrot.lane.b32.xlu0 %v377, 112
    %v402 = vpop.permute.xlu0 %401
    %403 = vrot.lane.b32.xlu0 %v378, 112
    %v404 = vpop.permute.xlu0 %403
    %405 = vrot.lane.b32.xlu0 %v379, 112
    %v406 = vpop.permute.xlu0 %405
    %407 = vrot.lane.b32.xlu0 %v380, 112
    %v408 = vpop.permute.xlu0 %407
    %409 = vrot.lane.b32.xlu0 %v381, 112
    %v410 = vpop.permute.xlu0 %409
    %411 = vrot.lane.b32.xlu0 %v382, 112
    %v412 = vpop.permute.xlu0 %411
    %421 = vrot.lane.b32.xlu0 %v388, 112
    %v422 = vpop.permute.xlu0 %421
    %424 = vmatprep.subr.mxu0 0.0
    %425 = vmatpush1.msra.mxu0 0.0
    %426 = vmatprep.subr.mxu0 0.0
    %427 = vmatpush1.msra.mxu0 0.0
    %428 = vmatprep.subr.mxu0 0.0
    %429 = vmatpush1.msra.mxu0 0.0
    %430 = vmatprep.subr.mxu0 0.0
    %431 = vmatpush1.msra.mxu0 0.0
    %432 = vmatprep.subr.mxu0 0.0
    %433 = vmatpush1.msra.mxu0 0.0
    %434 = vmatprep.subr.mxu0 0.0
    %435 = vmatpush1.msra.mxu0 0.0
    %436 = vmatprep.subr.mxu0 0.0
    %437 = vmatpush1.msra.mxu0 0.0
    %438 = vmatprep.subr.mxu0 0.0
    %439 = vmatpush1.msra.mxu0 0.0
    %440 = vmatprep.subr.mxu0 0.0
    %441 = vmatpush1.msra.mxu0 %v412
    %442 = vmatprep.subr.mxu0 0.0
    %443 = vmatpush1.msra.mxu0 %v410
    %444 = vmatprep.subr.mxu0 0.0
    %445 = vmatpush1.msra.mxu0 %v408
    %446 = vmatprep.subr.mxu0 0.0
    %447 = vmatpush1.msra.mxu0 %v406
    %448 = vmatprep.subr.mxu0 0.0
    %449 = vmatpush1.msra.mxu0 %v404
    %450 = vmatprep.subr.mxu0 0.0
    %451 = vmatpush1.msra.mxu0 %v402
    %452 = vmatprep.subr.mxu0 0.0
    %453 = vmatpush1.msra.mxu0 %v400
    %454 = vmatprep.subr.mxu0 0.0
    %455 = vmatpush1.msra.mxu0 %v398
    %456 = vmatprep.subr.mxu0 0.0
    %457 = vmatpush2.msra.mxu0 0.0
    %458 = vmatprep.subr.mxu0 0.0
    %459 = vmatpush2.msra.mxu0 0.0
    %460 = vmatprep.subr.mxu0 0.0
    %461 = vmatpush2.msra.mxu0 0.0
    %462 = vmatprep.subr.mxu0 0.0
    %463 = vmatpush2.msra.mxu0 0.0
    %464 = vmatprep.subr.mxu0 0.0
    %465 = vmatpush2.msra.mxu0 0.0
    %466 = vmatprep.subr.mxu0 0.0
    %467 = vmatpush2.msra.mxu0 0.0
    %468 = vmatprep.subr.mxu0 0.0
    %469 = vmatpush2.msra.mxu0 0.0
    %470 = vmatprep.subr.mxu0 0.0
    %471 = vmatpush2.msra.mxu0 0.0
    %472 = vmatprep.subr.mxu0 0.0
    %473 = vmatpush2.msra.mxu0 0.0
    %474 = vmatprep.subr.mxu0 0.0
    %475 = vmatpush2.msra.mxu0 0.0
    %476 = vmatprep.subr.mxu0 0.0
    %477 = vmatpush2.msra.mxu0 0.0
    %478 = vmatprep.subr.mxu0 0.0
    %479 = vmatpush2.msra.mxu0 0.0
    %480 = vmatprep.subr.mxu0 0.0
    %481 = vmatpush2.msra.mxu0 0.0
    %482 = vmatprep.subr.mxu0 0.0
    %483 = vmatpush2.msra.mxu0 0.0
    %484 = vmatprep.subr.mxu0 0.0
    %485 = vmatpush2.msra.mxu0 0.0
    %486 = vmatprep.subr.mxu0 0.0
    %487 = vmatpush2.msra.mxu0 0.0
    %488 = vmatprep.mubr.f32.mxu0 0.0
    %489 = vmatmul.mubr.f32.gmra.mxu0 %v301
    %v490 = vpop.f32.mrf.mxu0
    %v491 = vadd.f32 %v422, %v490
    %v492 = vpop.f32.mrf.mxu0
    %493 = vdwg.mxu0
    %494 = vst.msk [vmem:[#allocation8] sm:$0xff] %vm373, %v491
    // Predicated region
    $region34: #{tpu_custom_call.1} parent=1 // pred_check
      _
    $region35: #{tpu_custom_call.1} parent=1 // pred_check_branch
      %496 = sbr.rel (0) target = $region37
    $region36: #{tpu_custom_call.1} parent=1 // pred_region
      %s498 = ssub.s32 128, 128
      %499 = vsyncadd [#allocation4], %s498
      %s501 = sshll.u32 [#allocation7], 4
      %s502 = int_to_ptr.vmem [resolvable:$true] %s501
      %504 = dma.vmem_to_hbm [thread:$0]  %s502, 128, %s6, [#allocation4]
    $region37: #{tpu_custom_call.1} parent=1 // pred_fallthru
      _
    // Predicated region
    $region38: #{tpu_custom_call.1} parent=1 // pred_check
      _
    $region39: #{tpu_custom_call.1} parent=1 // pred_check_branch
      %506 = sbr.rel (0) target = $region41
    $region40: #{tpu_custom_call.1} parent=1 // pred_region
      %s508 = ssub.s32 128, 128
      %509 = vsyncadd [#allocation9], %s508
      %s511 = sshll.u32 [#allocation8], 4
      %s512 = int_to_ptr.vmem [resolvable:$true] %s511
      %514 = dma.vmem_to_hbm [thread:$0]  %s512, 128, %s7, [#allocation9]
    $region41: #{tpu_custom_call.1} parent=1 // pred_fallthru
      _
    // Predicated region
    $region42: #{tpu_custom_call.1} parent=1 // pred_check
      _
    $region43: #{tpu_custom_call.1} parent=1 // pred_check_branch
      %516 = sbr.rel (0) target = $region45
    $region44: #{tpu_custom_call.1} parent=1 // pred_region
      %517 = dma.done [#allocation4], 128
    $region45: #{tpu_custom_call.1} parent=1 // pred_fallthru
      _
    // Predicated region
    $region46: #{tpu_custom_call.1} parent=1 // pred_check
      _
    $region47: #{tpu_custom_call.1} parent=1 // pred_check_branch
      %519 = sbr.rel (0) target = $region49
    $region48: #{tpu_custom_call.1} parent=1 // pred_region
      %520 = dma.done [#allocation9], 128
    $region49: #{tpu_custom_call.1} parent=1 // pred_fallthru
      _
    %521 = vsyncpa [#allocation3], 1
    %522 = vsyncpa [#allocation6], 1
    %523 = vsyncpa [#allocation4], 1
    %524 = vsyncpa [#allocation9], 1

</llo_original>
